<compile_context>
chip_gen: v7x
topology: tpu7x:2x2x1
jax: 0.10.0
libtpu: 0.0.40
codegen_flags: <defaults>
</compile_context>

<pallas_src>
import functools

import jax
import jax.numpy as jnp
from jax.experimental import pallas as pl
from jax.experimental.pallas import tpu as pltpu

LANE = 128
TARGET_BLOCK_BYTES = 4 << 20          # ~4 MiB per operand per grid step (aligned path)
RAGGED_TARGET_BLOCK_BYTES = 512 << 10  # smaller blocks on the rare 1-D ragged path
VMEM_LIMIT_BYTES = 32 * 1024 * 1024    # 24 MiB live worst case -> headroom on all gens
MIN_GRID_STEPS = 4                     # keep the DMA pipeline + both v7x TCs busy


def _round_up(x, m):
    return -(-x // m) * m


def _activation(y, activation):
    if activation is None:
        return y
    if activation == "relu":
        return jnp.maximum(y, 0.0)
    if activation == "relu6":
        return jnp.clip(y, 0.0, 6.0)
    if activation == "sigmoid":
        return jax.nn.sigmoid(y)
    raise ValueError(f"unsupported activation: {activation}")


def _clamp_bounds(mode, xb=8):
    if mode in ("fpt", "qat"):
        # clamping_qa(xb=8, wide=False): [-1, 1 - 2^-(xb-1)]
        return -1.0, float(2 ** (xb - 1) - 1) / float(2 ** (xb - 1))
    if mode == "eval":
        # clamping_hw(xb=8, wide=False): [-2^(xb-1), 2^(xb-1) - 1]
        return -float(2 ** (xb - 1)), float(2 ** (xb - 1) - 1)
    if mode == "fpt_unconstrained":
        return None, None
    raise ValueError(f"unsupported quantization mode: {mode}")


def _add_residual_kernel(x_ref, res_ref, o_ref, *, activation, min_val, max_val):
    # Add + activation + clamp: a few VALU ops/elem (sigmoid goes to the otherwise
    # idle EUP slot).  The kernel is HBM-DMA-bound; compute is free filler.
    y = x_ref[...].astype(jnp.float32) + res_ref[...].astype(jnp.float32)
    y = _activation(y, activation)
    if min_val is not None:
        y = jnp.clip(y, min_val, max_val)
    o_ref[...] = y.astype(o_ref.dtype)


def add_residual_forward(x, res, *, activation=None, quantization_mode="fpt"):
    """Pallas implementation of add_residual.forward(x, res)."""
    assert x.shape == res.shape and x.dtype == res.dtype
    min_val, max_val = _clamp_bounds(quantization_mode)

    orig_shape = x.shape
    total = x.size
    itemsize = jnp.dtype(x.dtype).itemsize
    # Native sublane packing: 8 rows for 4-byte, 16 for 2-byte, 32 for 1-byte dtypes.
    sublane = max(8, 32 // itemsize)

    kernel = functools.partial(
        _add_residual_kernel,
        activation=activation,
        min_val=min_val,
        max_val=max_val,
    )
    compiler_params = pltpu.CompilerParams(
        dimension_semantics=("parallel",),
        vmem_limit_bytes=VMEM_LIMIT_BYTES,
    )

    xf = x.reshape(-1)
    rf = res.reshape(-1)

    if total % LANE == 0:
        # ---- Fast path: lane-dense 2-D layout -> unmasked full-width vector stores.
        width = next(w for w in (1024, 512, 256, 128) if total % w == 0)
        rows = total // width

        # ~TARGET_BLOCK_BYTES per operand per step, in sublane-multiple rows.
        block_rows = (TARGET_BLOCK_BYTES // (width * itemsize)) // sublane * sublane
        block_rows = max(sublane, block_rows)
        # Never collapse to a 1-step grid when rows permit: keep >= MIN_GRID_STEPS
        # steps so v7x megacore sharding and the load/compute/store pipeline stay busy.
        cap = _round_up(pl.cdiv(rows, MIN_GRID_STEPS), sublane)
        block_rows = max(sublane, min(block_rows, cap))
        if block_rows > rows:
            block_rows = rows  # tiny tensor: full-extent block is always legal
        grid = (pl.cdiv(rows, block_rows),)

        xf = xf.reshape(rows, width)
        rf = rf.reshape(rows, width)
        out = pl.pallas_call(
            kernel,
            out_shape=jax.ShapeDtypeStruct((rows, width), x.dtype),
            grid_spec=pltpu.PrefetchScalarGridSpec(
                num_scalar_prefetch=0,
                grid=grid,
                in_specs=[
                    pl.BlockSpec((block_rows, width), lambda i: (i, 0)),
                    pl.BlockSpec((block_rows, width), lambda i: (i, 0)),
                ],
                out_specs=pl.BlockSpec((block_rows, width), lambda i: (i, 0)),
            ),
            compiler_params=compiler_params,
        )(xf, rf)
        return out.reshape(orig_shape)

    # ---- Ragged path (total not a multiple of 128): flat 1-D blocked kernel.
    # No jnp.pad of the inputs and no output slice: Pallas masks the partial last
    # block's loads/stores, so ragged shapes pay a single HBM pass.
    block_len = (RAGGED_TARGET_BLOCK_BYTES // itemsize) // LANE * LANE
    cap = _round_up(pl.cdiv(total, MIN_GRID_STEPS), LANE)
    block_len = max(LANE, min(block_len, cap))
    if block_len > total:
        block_len = total  # tiny tensor: full-extent block is always legal
    grid = (pl.cdiv(total, block_len),)

    out = pl.pallas_call(
        kernel,
        out_shape=jax.ShapeDtypeStruct((total,), x.dtype),
        grid_spec=pltpu.PrefetchScalarGridSpec(
            num_scalar_prefetch=0,
            grid=grid,
            in_specs=[
                pl.BlockSpec((block_len,), lambda i: (i,)),
                pl.BlockSpec((block_len,), lambda i: (i,)),
            ],
            out_specs=pl.BlockSpec((block_len,), lambda i: (i,)),
        ),
        compiler_params=compiler_params,
    )(xf, rf)
    return out.reshape(orig_shape)


def _reference(x, res, *, activation=None, quantization_mode="fpt"):
    y = _activation(x + res, activation)
    min_val, max_val = _clamp_bounds(quantization_mode)
    if min_val is not None:
        y = jnp.clip(y, min_val, max_val)
    return y


if __name__ == "__main__":
    key = jax.random.PRNGKey(0)
    k1, k2 = jax.random.split(key)

    # NCHW, as in the PyTorch module's typical conv usage.
    x = jax.random.normal(k1, (2, 4, 16, 16), dtype=jnp.float32) * 2.0
    res = jax.random.normal(k2, (2, 4, 16, 16), dtype=jnp.float32) * 2.0

    # Default module config: activation=None (Identity), mode='fpt' (clamping_qa 8-bit).
    out = add_residual_forward(x, res, activation=None, quantization_mode="fpt")
    out = jax.block_until_ready(out)
    ref = _reference(x, res, activation=None, quantization_mode="fpt")
    assert out.shape == x.shape and out.dtype == x.dtype
    assert jnp.allclose(out, ref, atol=1e-6, rtol=1e-6)

    # relu + eval (hw clamp) path.
    out2 = jax.block_until_ready(
        add_residual_forward(x * 100.0, res * 100.0, activation="relu",
                             quantization_mode="eval")
    )
    ref2 = _reference(x * 100.0, res * 100.0, activation="relu",
                      quantization_mode="eval")
    assert jnp.allclose(out2, ref2, atol=1e-5, rtol=1e-5)

    # Ragged (non-multiple-of-128) shape exercises the 1-D masked-block path.
    k3, k4 = jax.random.split(k2)
    xr = jax.random.normal(k3, (2, 3, 7, 5), dtype=jnp.float32)
    rr = jax.random.normal(k4, (2, 3, 7, 5), dtype=jnp.float32)
    out3 = jax.block_until_ready(
        add_residual_forward(xr, rr, activation="sigmoid",
                             quantization_mode="fpt_unconstrained")
    )
    ref3 = _reference(xr, rr, activation="sigmoid",
                      quantization_mode="fpt_unconstrained")
    assert out3.shape == xr.shape
    assert jnp.allclose(out3, ref3, atol=1e-6, rtol=1e-6)

    print("KERNEL_OK")
</pallas_src>

<mosaic_0001>
module attributes {stable_mosaic.version = 11 : i64} {
  func.func @_add_residual_kernel(%arg0: i32, %arg1: memref<2x1024xf32, #tpu.memory_space<vmem>>, %arg2: memref<2x1024xf32, #tpu.memory_space<vmem>>, %arg3: memref<2x1024xf32, #tpu.memory_space<vmem>>) attributes {dimension_semantics = [#tpu.dimension_semantics<parallel>], iteration_bounds = array<i64: 1>, scalar_prefetch = 0 : i64, scratch_operands = 0 : i64, tpu.core_type = #tpu.core_type<tc>, window_params = [{transform_indices = @transform_0, window_bounds = array<i64: 2, 1024>}, {transform_indices = @transform_1, window_bounds = array<i64: 2, 1024>}, {transform_indices = @transform_2, window_bounds = array<i64: 2, 1024>}]} {
    %c0 = arith.constant 0 : index
    %c0_0 = arith.constant 0 : index
    %0 = vector.load %arg1[%c0, %c0_0] : memref<2x1024xf32, #tpu.memory_space<vmem>>, vector<2x1024xf32>
    %c0_1 = arith.constant 0 : index
    %c0_2 = arith.constant 0 : index
    %1 = vector.load %arg2[%c0_1, %c0_2] : memref<2x1024xf32, #tpu.memory_space<vmem>>, vector<2x1024xf32>
    %2 = arith.addf %0, %1 : vector<2x1024xf32>
    %cst = arith.constant -1.000000e+00 : f32
    %cst_3 = arith.constant 0.9921875 : f32
    %3 = vector.broadcast %cst : f32 to vector<2x1024xf32>
    %4 = arith.maximumf %3, %2 : vector<2x1024xf32>
    %5 = vector.broadcast %cst_3 : f32 to vector<2x1024xf32>
    %6 = arith.minimumf %5, %4 : vector<2x1024xf32>
    %c0_4 = arith.constant 0 : index
    %c0_5 = arith.constant 0 : index
    %7 = vector.load %arg3[%c0_4, %c0_5] : memref<2x1024xf32, #tpu.memory_space<vmem>>, vector<2x1024xf32>
    tpu.vector_store %arg3[%c0_4, %c0_5], %6 {strides = array<i32>} : memref<2x1024xf32, #tpu.memory_space<vmem>>, vector<2x1024xf32>,
    return
  }
  func.func @transform_0(%arg0: i32) -> (i32, i32) {
    %c0_i32 = arith.constant 0 : i32
    %c0_i32_0 = arith.constant 0 : i32
    return %arg0, %c0_i32 : i32, i32
  }
  func.func @transform_1(%arg0: i32) -> (i32, i32) {
    %c0_i32 = arith.constant 0 : i32
    %c0_i32_0 = arith.constant 0 : i32
    return %arg0, %c0_i32 : i32, i32
  }
  func.func @transform_2(%arg0: i32) -> (i32, i32) {
    %c0_i32 = arith.constant 0 : i32
    %c0_i32_0 = arith.constant 0 : i32
    return %arg0, %c0_i32 : i32, i32
  }
}

</mosaic_0001>

<llo_original>
// kernel: tpu_custom_call.1
$region0: #{tpu_custom_call.1}
  #allocation0 [shape = 'u32[]', space=smem, size = 0x4, offset = 0x4, fixed_abs, tag = 'smem constant byte address 0x4 - core index']
  #allocation1 [shape = 'u32[144,128]{1,0:T(1,128)}', space=vmem, size = 0x12000, scoped, tag = 'internal scratch']
  %s0 = inlined_call_operand.hbm [shape: f32[2,1024], index: 0, kind: input, shape index: {}]
  %s1 = inlined_call_operand.hbm [shape: f32[2,1024], index: 1, kind: input, shape index: {}]
  %s2 = inlined_call_operand.hbm [shape: f32[2,1024], index: 2, kind: output, shape index: {}]
  %s3 = sld [smem:[#allocation0]]
  $region26: #{tpu_custom_call.1} parent=0
    _
  %s5 = ssub.s32 1, %s3
  %s6 = scalar_select 0, %s5, %s3
  $region1: #{tpu_custom_call.1} parent=0
    #allocation2 [shape = 'u8[8192]{0}', space=vmem, size = 0x2000, scoped, tag = 'input window, operand 0, single buffered']
    #allocation3 [shape = 's32[1]{0}', space=sflag, size = 0x4, scoped, tag = 'scoped memory for tpu_custom_call.1']
    #allocation4 [shape = 's32[1]{0}', space=sflag, size = 0x4, scoped, tag = 'scoped memory for tpu_custom_call.1']
    #allocation5 [shape = 'u8[8192]{0}', space=vmem, size = 0x2000, scoped, tag = 'input window, operand 1, single buffered']
    #allocation6 [shape = 's32[1]{0}', space=sflag, size = 0x4, scoped, tag = 'scoped memory for tpu_custom_call.1']
    #allocation7 [shape = 'u8[8192]{0}', space=vmem, size = 0x2000, scoped, tag = 'output window, operand 0, single buffered']
    %7 = vsyncpa [#allocation3], 0
    %8 = vsyncpa [#allocation6], 0
    %9 = vsyncpa [#allocation4], 0
    // Predicated region
    $region2: #{tpu_custom_call.1} parent=1 // pred_check
      _
    $region3: #{tpu_custom_call.1} parent=1 // pred_check_branch
      %11 = sbr.rel (0) target = $region5
    $region4: #{tpu_custom_call.1} parent=1 // pred_region
      %s13 = ssub.s32 256, 256
      %14 = vsyncadd [#allocation3], %s13
      %s16 = sshll.u32 [#allocation2], 4
      %s17 = int_to_ptr.vmem [resolvable:$true] %s16
      %19 = dma.hbm_to_vmem [thread:$0]  %s0, 256, %s17, [#allocation3]
    $region5: #{tpu_custom_call.1} parent=1 // pred_fallthru
      _
    // Predicated region
    $region6: #{tpu_custom_call.1} parent=1 // pred_check
      _
    $region7: #{tpu_custom_call.1} parent=1 // pred_check_branch
      %21 = sbr.rel (0) target = $region9
    $region8: #{tpu_custom_call.1} parent=1 // pred_region
      %s23 = ssub.s32 256, 256
      %24 = vsyncadd [#allocation6], %s23
      %s26 = sshll.u32 [#allocation5], 4
      %s27 = int_to_ptr.vmem [resolvable:$true] %s26
      %29 = dma.hbm_to_vmem [thread:$0]  %s1, 256, %s27, [#allocation6]
    $region9: #{tpu_custom_call.1} parent=1 // pred_fallthru
      _
    // Predicated region
    $region10: #{tpu_custom_call.1} parent=1 // pred_check
      _
    $region11: #{tpu_custom_call.1} parent=1 // pred_check_branch
      %31 = sbr.rel (0) target = $region13
    $region12: #{tpu_custom_call.1} parent=1 // pred_region
      %32 = dma.done [#allocation3], 256
    $region13: #{tpu_custom_call.1} parent=1 // pred_fallthru
      _
    // Predicated region
    $region14: #{tpu_custom_call.1} parent=1 // pred_check
      _
    $region15: #{tpu_custom_call.1} parent=1 // pred_check_branch
      %34 = sbr.rel (0) target = $region17
    $region16: #{tpu_custom_call.1} parent=1 // pred_region
      %35 = dma.done [#allocation6], 256
    $region17: #{tpu_custom_call.1} parent=1 // pred_fallthru
      _
    %v36 = vld [vmem:[#allocation2] sm:$0xff]
    %v37 = vld [vmem:[#allocation2 + $0x8] sm:$0xff]
    %v38 = vld [vmem:[#allocation5] sm:$0xff]
    %v39 = vld [vmem:[#allocation5 + $0x8] sm:$0xff]
    %v40 = vadd.f32 %v36, %v38
    %v41 = vadd.f32 %v37, %v39
    %v42 = vmax.f32 %v40, -1.0
    %v43 = vmax.f32 %v41, -1.0
    %v44 = vmin.f32 %v42, 0.9921875
    %v45 = vmin.f32 %v43, 0.9921875
    %46 = vst [vmem:[#allocation7] sm:$0xff] %v44
    %47 = vst [vmem:[#allocation7 + $0x8] sm:$0xff] %v45
    // Predicated region
    $region18: #{tpu_custom_call.1} parent=1 // pred_check
      _
    $region19: #{tpu_custom_call.1} parent=1 // pred_check_branch
      %49 = sbr.rel (0) target = $region21
    $region20: #{tpu_custom_call.1} parent=1 // pred_region
      %s51 = ssub.s32 256, 256
      %52 = vsyncadd [#allocation4], %s51
      %s54 = sshll.u32 [#allocation7], 4
      %s55 = int_to_ptr.vmem [resolvable:$true] %s54
      %57 = dma.vmem_to_hbm [thread:$0]  %s55, 256, %s2, [#allocation4]
    $region21: #{tpu_custom_call.1} parent=1 // pred_fallthru
      _
    // Predicated region
    $region22: #{tpu_custom_call.1} parent=1 // pred_check
      _
    $region23: #{tpu_custom_call.1} parent=1 // pred_check_branch
      %59 = sbr.rel (0) target = $region25
    $region24: #{tpu_custom_call.1} parent=1 // pred_region
      %60 = dma.done [#allocation4], 256
    $region25: #{tpu_custom_call.1} parent=1 // pred_fallthru
      _
    %61 = vsyncpa [#allocation3], 1
    %62 = vsyncpa [#allocation6], 1
    %63 = vsyncpa [#allocation4], 1

</llo_original>
